<compile_context>
chip_gen: v5e
topology: v5e:2x2
jax: 0.10.0
libtpu: 0.0.40
codegen_flags: <defaults>
</compile_context>

<pallas_src>
import functools

import jax
import jax.numpy as jnp
from jax.experimental import pallas as pl
from jax.experimental.pallas import tpu as pltpu

# Model sizes
NUM_IN_FEATURES = 4
NUM_H1_NEURONS = 16
NUM_H2_NEURONS = 32
NUM_H3_NEURONS = 16
NUM_OUT_CLASSES = 3

DEFAULT_TILE_B = 2048   # batch tile (lanes); multiple of 128
_TOTAL_MACS_PER_ROW = (NUM_IN_FEATURES * NUM_H1_NEURONS
                       + NUM_H1_NEURONS * NUM_H2_NEURONS
                       + NUM_H2_NEURONS * NUM_H3_NEURONS
                       + NUM_H3_NEURONS * NUM_OUT_CLASSES)   # 1232


def mlp_kernel(x_ref,
               w1_ref, b1_ref,
               w2_ref, b2_ref,
               w3_ref, b3_ref,
               w4_ref, b4_ref,
               o_ref):
    # Transposed fused 4-layer chain: x is (4, tb), intermediates (16, tb) /
    # (32, tb) / (16, tb), output (3, tb).  Matmul operands may be bf16;
    # accumulation and bias/ReLU stay f32 (v5e-friendly VPU math).
    x = x_ref[...]                                                    # (4, tb)

    h = jnp.dot(w1_ref[...], x, preferred_element_type=jnp.float32) + b1_ref[...]
    h = jnp.maximum(h, 0.0).astype(w2_ref.dtype)                      # (16, tb)

    h = jnp.dot(w2_ref[...], h, preferred_element_type=jnp.float32) + b2_ref[...]
    h = jnp.maximum(h, 0.0).astype(w3_ref.dtype)                      # (32, tb)

    h = jnp.dot(w3_ref[...], h, preferred_element_type=jnp.float32) + b3_ref[...]
    h = jnp.maximum(h, 0.0).astype(w4_ref.dtype)                      # (16, tb)

    out = jnp.dot(w4_ref[...], h, preferred_element_type=jnp.float32) + b4_ref[...]
    o_ref[...] = out.astype(o_ref.dtype)                              # (3, tb) lane-dense store


def _round_up(n, m):
    return ((n + m - 1) // m) * m


def _cdiv(a, b):
    return -(-a // b)


def init_params(key):
    """Deterministic init mimicking nn.Linear's uniform(-1/sqrt(fan_in), ...).

    Weights stored (in, out), biases (1, out) -- matches reference_forward.
    """
    dims = [NUM_IN_FEATURES, NUM_H1_NEURONS, NUM_H2_NEURONS,
            NUM_H3_NEURONS, NUM_OUT_CLASSES]
    params = {}
    for i in range(4):
        fan_in, fan_out = dims[i], dims[i + 1]
        key, kw, kb = jax.random.split(key, 3)
        bound = 1.0 / jnp.sqrt(jnp.float32(fan_in))
        params[f"w{i+1}"] = jax.random.uniform(
            kw, (fan_in, fan_out), jnp.float32, -bound, bound)
        params[f"b{i+1}"] = jax.random.uniform(
            kb, (1, fan_out), jnp.float32, -bound, bound)
    return params


def prepare_params(params, *, use_bf16=False):
    """One-time (out of hot path) layout/dtype prep for the kernel.

    Weights -> (out, in) [matmul operand dtype], biases -> (out, 1) f32.
    """
    cdt = jnp.bfloat16 if use_bf16 else jnp.float32
    prepared = []
    for i in range(1, 5):
        w = jnp.asarray(params[f"w{i}"], jnp.float32).T.astype(cdt)   # (out, in)
        b = jnp.asarray(params[f"b{i}"], jnp.float32).reshape(-1, 1)  # (out, 1) f32
        prepared.extend((w, b))
    return tuple(prepared)


@functools.partial(jax.jit, static_argnames=("tile_b",))
def _mlp_forward_impl(x, prepared, tile_b):
    w1, b1, w2, b2, w3, b3, w4, b4 = prepared
    B = x.shape[0]

    # --- tile selection: multiple of 128 lanes, minimal tail padding, and
    # --- >= 2 grid steps for large batches so both v7x TCs get work.
    n_tiles = max(1, _cdiv(B, tile_b))
    if B >= 256:
        n_tiles = max(n_tiles, 2)
    tb = _round_up(_cdiv(B, n_tiles), 128)
    Bp = tb * n_tiles

    # Transpose to features-on-sublanes / batch-on-lanes and pad the batch.
    xt = x.T.astype(w1.dtype)                          # (4, B)
    if Bp != B:
        xt = jnp.pad(xt, ((0, 0), (0, Bp - B)))        # (4, Bp)

    def whole(arr):
        # Whole-array resident block; rank captured via default arg
        # (avoids the late-binding-lambda footgun).
        return pl.BlockSpec(arr.shape, lambda i, _nd=arr.ndim: (0,) * _nd)

    in_specs = [
        pl.BlockSpec((NUM_IN_FEATURES, tb), lambda i: (0, i)),   # x: tiled over batch lanes
        whole(w1), whole(b1),
        whole(w2), whole(b2),
        whole(w3), whole(b3),
        whole(w4), whole(b4),
    ]
    out_spec = pl.BlockSpec((NUM_OUT_CLASSES, tb), lambda i: (0, i))
    out_shape = jax.ShapeDtypeStruct((NUM_OUT_CLASSES, Bp), jnp.float32)

    itemsize = jnp.dtype(w1.dtype).itemsize
    bytes_accessed = (
        Bp * NUM_IN_FEATURES * itemsize                       # x in
        + sum(int(a.size) * a.dtype.itemsize for a in prepared)  # weights/biases
        + Bp * NUM_OUT_CLASSES * 4)                           # out (f32)
    cost = pl.CostEstimate(flops=2 * Bp * _TOTAL_MACS_PER_ROW,
                           transcendentals=0,
                           bytes_accessed=int(bytes_accessed))

    out_t = pl.pallas_call(
        mlp_kernel,
        grid=(n_tiles,),
        in_specs=in_specs,
        out_specs=out_spec,
        out_shape=out_shape,
        compiler_params=pltpu.CompilerParams(
            dimension_semantics=("parallel",)),   # shards across v7x's 2 TCs
        cost_estimate=cost,
    )(xt, w1, b1, w2, b2, w3, b3, w4, b4)

    # Strip batch padding and return (B, 3).
    return out_t[:, :B].T


def mlp_forward(x, prepared, *, tile_b=DEFAULT_TILE_B):
    """x: (B, NUM_IN_FEATURES) float32.  prepared: output of prepare_params()."""
    return _mlp_forward_impl(x, prepared, tile_b)


def reference_forward(x, params):
    h = jnp.maximum(x @ params["w1"] + params["b1"], 0.0)
    h = jnp.maximum(h @ params["w2"] + params["b2"], 0.0)
    h = jnp.maximum(h @ params["w3"] + params["b3"], 0.0)
    return h @ params["w4"] + params["b4"]


if __name__ == "__main__":
    key = jax.random.PRNGKey(0)
    params = init_params(key)
    prepared_f32 = prepare_params(params)

    # Small batch (single grid step, tb=128) -- exact f32 path.
    key, kx = jax.random.split(key)
    batch = 8
    x = jax.random.normal(kx, (batch, NUM_IN_FEATURES), jnp.float32)
    out = jax.block_until_ready(mlp_forward(x, prepared_f32))
    ref = reference_forward(x, params)
    assert out.shape == (batch, NUM_OUT_CLASSES), out.shape
    assert jnp.allclose(out, ref, atol=1e-5, rtol=1e-5), "f32 mismatch vs reference"

    # Multi-tile grid path (B=300 -> 2 tiles of 256 lanes) -- still exact f32.
    key, kx2 = jax.random.split(key)
    x2 = jax.random.normal(kx2, (300, NUM_IN_FEATURES), jnp.float32)
    out2 = jax.block_until_ready(mlp_forward(x2, prepared_f32))
    ref2 = reference_forward(x2, params)
    assert out2.shape == (300, NUM_OUT_CLASSES), out2.shape
    assert jnp.allclose(out2, ref2, atol=1e-5, rtol=1e-5), "gridded f32 mismatch"

    # bf16 matmul-operand path (v6e/v7x MXU-friendly), f32 accumulation.
    prepared_bf16 = prepare_params(params, use_bf16=True)
    out_bf16 = jax.block_until_ready(mlp_forward(x, prepared_bf16))
    assert out_bf16.shape == (batch, NUM_OUT_CLASSES)
    assert bool(jnp.all(jnp.isfinite(out_bf16)))
    assert float(jnp.max(jnp.abs(out_bf16 - ref))) < 0.25, "bf16 path diverged"

    print("KERNEL_OK")
</pallas_src>

<mosaic_0001>
module attributes {stable_mosaic.version = 11 : i64} {
  func.func @mlp_kernel(%arg0: i32, %arg1: memref<4x128xf32, #tpu.memory_space<vmem>>, %arg2: memref<16x4xf32, #tpu.memory_space<vmem>>, %arg3: memref<16x1xf32, #tpu.memory_space<vmem>>, %arg4: memref<32x16xf32, #tpu.memory_space<vmem>>, %arg5: memref<32x1xf32, #tpu.memory_space<vmem>>, %arg6: memref<16x32xf32, #tpu.memory_space<vmem>>, %arg7: memref<16x1xf32, #tpu.memory_space<vmem>>, %arg8: memref<3x16xf32, #tpu.memory_space<vmem>>, %arg9: memref<3x1xf32, #tpu.memory_space<vmem>>, %arg10: memref<3x128xf32, #tpu.memory_space<vmem>>) attributes {dimension_semantics = [#tpu.dimension_semantics<parallel>], iteration_bounds = array<i64: 1>, scalar_prefetch = 0 : i64, scratch_operands = 0 : i64, tpu.core_type = #tpu.core_type<tc>, window_params = [{transform_indices = @transform_0, window_bounds = array<i64: 4, 128>}, {pipeline_mode = #tpu.pipeline_mode<synchronous>, transform_indices = @transform_1, window_bounds = array<i64: 16, 4>}, {pipeline_mode = #tpu.pipeline_mode<synchronous>, transform_indices = @transform_2, window_bounds = array<i64: 16, 1>}, {pipeline_mode = #tpu.pipeline_mode<synchronous>, transform_indices = @transform_3, window_bounds = array<i64: 32, 16>}, {pipeline_mode = #tpu.pipeline_mode<synchronous>, transform_indices = @transform_4, window_bounds = array<i64: 32, 1>}, {pipeline_mode = #tpu.pipeline_mode<synchronous>, transform_indices = @transform_5, window_bounds = array<i64: 16, 32>}, {pipeline_mode = #tpu.pipeline_mode<synchronous>, transform_indices = @transform_6, window_bounds = array<i64: 16, 1>}, {pipeline_mode = #tpu.pipeline_mode<synchronous>, transform_indices = @transform_7, window_bounds = array<i64: 3, 16>}, {pipeline_mode = #tpu.pipeline_mode<synchronous>, transform_indices = @transform_8, window_bounds = array<i64: 3, 1>}, {transform_indices = @transform_9, window_bounds = array<i64: 3, 128>}]} {
    %c0 = arith.constant 0 : index
    %c0_0 = arith.constant 0 : index
    %0 = vector.load %arg1[%c0, %c0_0] : memref<4x128xf32, #tpu.memory_space<vmem>>, vector<4x128xf32>
    %c0_1 = arith.constant 0 : index
    %c0_2 = arith.constant 0 : index
    %1 = vector.load %arg2[%c0_1, %c0_2] : memref<16x4xf32, #tpu.memory_space<vmem>>, vector<16x4xf32>
    %cst = arith.constant dense<0.000000e+00> : vector<16x128xf32>
    %2 = tpu.matmul %1, %0, %cst {dimension_numbers = #tpu.dot_dimension_numbers<[1], [0], [0], [1], [0, 0, 1, 1], [], []>} : vector<16x4xf32>, vector<4x128xf32>, vector<16x128xf32> -> vector<16x128xf32>
    %c0_3 = arith.constant 0 : index
    %c0_4 = arith.constant 0 : index
    %3 = vector.load %arg3[%c0_3, %c0_4] : memref<16x1xf32, #tpu.memory_space<vmem>>, vector<16x1xf32>
    %4 = vector.broadcast %3 : vector<16x1xf32> to vector<16x128xf32>
    %5 = arith.addf %2, %4 : vector<16x128xf32>
    %cst_5 = arith.constant 0.000000e+00 : f32
    %6 = vector.broadcast %cst_5 : f32 to vector<16x128xf32>
    %7 = arith.maximumf %5, %6 : vector<16x128xf32>
    %c0_6 = arith.constant 0 : index
    %c0_7 = arith.constant 0 : index
    %8 = vector.load %arg4[%c0_6, %c0_7] : memref<32x16xf32, #tpu.memory_space<vmem>>, vector<32x16xf32>
    %cst_8 = arith.constant dense<0.000000e+00> : vector<32x128xf32>
    %9 = tpu.matmul %8, %7, %cst_8 {dimension_numbers = #tpu.dot_dimension_numbers<[1], [0], [0], [1], [0, 0, 1, 1], [], []>} : vector<32x16xf32>, vector<16x128xf32>, vector<32x128xf32> -> vector<32x128xf32>
    %c0_9 = arith.constant 0 : index
    %c0_10 = arith.constant 0 : index
    %10 = vector.load %arg5[%c0_9, %c0_10] : memref<32x1xf32, #tpu.memory_space<vmem>>, vector<32x1xf32>
    %11 = vector.broadcast %10 : vector<32x1xf32> to vector<32x128xf32>
    %12 = arith.addf %9, %11 : vector<32x128xf32>
    %cst_11 = arith.constant 0.000000e+00 : f32
    %13 = vector.broadcast %cst_11 : f32 to vector<32x128xf32>
    %14 = arith.maximumf %12, %13 : vector<32x128xf32>
    %c0_12 = arith.constant 0 : index
    %c0_13 = arith.constant 0 : index
    %15 = vector.load %arg6[%c0_12, %c0_13] : memref<16x32xf32, #tpu.memory_space<vmem>>, vector<16x32xf32>
    %cst_14 = arith.constant dense<0.000000e+00> : vector<16x128xf32>
    %16 = tpu.matmul %15, %14, %cst_14 {dimension_numbers = #tpu.dot_dimension_numbers<[1], [0], [0], [1], [0, 0, 1, 1], [], []>} : vector<16x32xf32>, vector<32x128xf32>, vector<16x128xf32> -> vector<16x128xf32>
    %c0_15 = arith.constant 0 : index
    %c0_16 = arith.constant 0 : index
    %17 = vector.load %arg7[%c0_15, %c0_16] : memref<16x1xf32, #tpu.memory_space<vmem>>, vector<16x1xf32>
    %18 = vector.broadcast %17 : vector<16x1xf32> to vector<16x128xf32>
    %19 = arith.addf %16, %18 : vector<16x128xf32>
    %cst_17 = arith.constant 0.000000e+00 : f32
    %20 = vector.broadcast %cst_17 : f32 to vector<16x128xf32>
    %21 = arith.maximumf %19, %20 : vector<16x128xf32>
    %c0_18 = arith.constant 0 : index
    %c0_19 = arith.constant 0 : index
    %22 = vector.load %arg8[%c0_18, %c0_19] : memref<3x16xf32, #tpu.memory_space<vmem>>, vector<3x16xf32>
    %cst_20 = arith.constant dense<0.000000e+00> : vector<3x128xf32>
    %23 = tpu.matmul %22, %21, %cst_20 {dimension_numbers = #tpu.dot_dimension_numbers<[1], [0], [0], [1], [0, 0, 1, 1], [], []>} : vector<3x16xf32>, vector<16x128xf32>, vector<3x128xf32> -> vector<3x128xf32>
    %c0_21 = arith.constant 0 : index
    %c0_22 = arith.constant 0 : index
    %24 = vector.load %arg9[%c0_21, %c0_22] : memref<3x1xf32, #tpu.memory_space<vmem>>, vector<3x1xf32>
    %25 = vector.broadcast %24 : vector<3x1xf32> to vector<3x128xf32>
    %26 = arith.addf %23, %25 : vector<3x128xf32>
    %c0_23 = arith.constant 0 : index
    %c0_24 = arith.constant 0 : index
    %27 = vector.load %arg10[%c0_23, %c0_24] : memref<3x128xf32, #tpu.memory_space<vmem>>, vector<3x128xf32>
    tpu.vector_store %arg10[%c0_23, %c0_24], %26 {strides = array<i32>} : memref<3x128xf32, #tpu.memory_space<vmem>>, vector<3x128xf32>,
    return
  }
  func.func @transform_0(%arg0: i32) -> (i32, i32) {
    %c0_i32 = arith.constant 0 : i32
    %c0_i32_0 = arith.constant 0 : i32
    return %c0_i32, %arg0 : i32, i32
  }
  func.func @transform_1(%arg0: i32) -> (i32, i32) {
    %c0_i32 = arith.constant 0 : i32
    %c0_i32_0 = arith.constant 0 : i32
    %c0_i32_1 = arith.constant 0 : i32
    return %c0_i32, %c0_i32_0 : i32, i32
  }
  func.func @transform_2(%arg0: i32) -> (i32, i32) {
    %c0_i32 = arith.constant 0 : i32
    %c0_i32_0 = arith.constant 0 : i32
    %c0_i32_1 = arith.constant 0 : i32
    return %c0_i32, %c0_i32_0 : i32, i32
  }
  func.func @transform_3(%arg0: i32) -> (i32, i32) {
    %c0_i32 = arith.constant 0 : i32
    %c0_i32_0 = arith.constant 0 : i32
    %c0_i32_1 = arith.constant 0 : i32
    return %c0_i32, %c0_i32_0 : i32, i32
  }
  func.func @transform_4(%arg0: i32) -> (i32, i32) {
    %c0_i32 = arith.constant 0 : i32
    %c0_i32_0 = arith.constant 0 : i32
    %c0_i32_1 = arith.constant 0 : i32
    return %c0_i32, %c0_i32_0 : i32, i32
  }
  func.func @transform_5(%arg0: i32) -> (i32, i32) {
    %c0_i32 = arith.constant 0 : i32
    %c0_i32_0 = arith.constant 0 : i32
    %c0_i32_1 = arith.constant 0 : i32
    return %c0_i32, %c0_i32_0 : i32, i32
  }
  func.func @transform_6(%arg0: i32) -> (i32, i32) {
    %c0_i32 = arith.constant 0 : i32
    %c0_i32_0 = arith.constant 0 : i32
    %c0_i32_1 = arith.constant 0 : i32
    return %c0_i32, %c0_i32_0 : i32, i32
  }
  func.func @transform_7(%arg0: i32) -> (i32, i32) {
    %c0_i32 = arith.constant 0 : i32
    %c0_i32_0 = arith.constant 0 : i32
    %c0_i32_1 = arith.constant 0 : i32
    return %c0_i32, %c0_i32_0 : i32, i32
  }
  func.func @transform_8(%arg0: i32) -> (i32, i32) {
    %c0_i32 = arith.constant 0 : i32
    %c0_i32_0 = arith.constant 0 : i32
    %c0_i32_1 = arith.constant 0 : i32
    return %c0_i32, %c0_i32_0 : i32, i32
  }
  func.func @transform_9(%arg0: i32) -> (i32, i32) {
    %c0_i32 = arith.constant 0 : i32
    %c0_i32_0 = arith.constant 0 : i32
    return %c0_i32, %arg0 : i32, i32
  }
}

</mosaic_0001>

<llo_original>
// kernel: _mlp_forward_impl.1
$region0: #{_mlp_forward_impl.1}
  #allocation0 [shape = 'u32[]', space=smem, size = 0x4, offset = 0x4, fixed_abs, tag = 'smem constant byte address 0x4 - core index']
  #allocation1 [shape = 'u32[72,128]{1,0:T(1,128)}', space=vmem, size = 0x9000, scoped, tag = 'internal scratch']
  %s0 = inlined_call_operand.vmem [shape: f32[4,128], index: 0, kind: input, shape index: {}]
  %s1 = inlined_call_operand.vmem [shape: f32[16,4], index: 1, kind: input, shape index: {}]
  %s2 = inlined_call_operand.vmem [shape: f32[16,1], index: 2, kind: input, shape index: {}]
  %s3 = inlined_call_operand.vmem [shape: f32[32,16], index: 3, kind: input, shape index: {}]
  %s4 = inlined_call_operand.vmem [shape: f32[32,1], index: 4, kind: input, shape index: {}]
  %s5 = inlined_call_operand.vmem [shape: f32[16,32], index: 5, kind: input, shape index: {}]
  %s6 = inlined_call_operand.vmem [shape: f32[16,1], index: 6, kind: input, shape index: {}]
  %s7 = inlined_call_operand.vmem [shape: f32[3,16], index: 7, kind: input, shape index: {}]
  %s8 = inlined_call_operand.vmem [shape: f32[3,1], index: 8, kind: input, shape index: {}]
  %s9 = inlined_call_operand.vmem [shape: f32[3,128], index: 9, kind: output, shape index: {}]
  %s10 = sld [smem:[#allocation0]]
  $region46: #{_mlp_forward_impl.1} parent=0
    _
  %s12 = ssub.s32 1, %s10
  %s13 = scalar_select 0, %s12, %s10
  // Predicated region
  $region2: #{_mlp_forward_impl.1} parent=0 // pred_check
    _
  $region3: #{_mlp_forward_impl.1} parent=0 // pred_check_branch
    %15 = sbr.rel (0) target = $region5
  $region4: #{_mlp_forward_impl.1} parent=0 // pred_region
    _
  $region5: #{_mlp_forward_impl.1} parent=0 // pred_fallthru
    _
  // Predicated region
  $region6: #{_mlp_forward_impl.1} parent=0 // pred_check
    _
  $region7: #{_mlp_forward_impl.1} parent=0 // pred_check_branch
    %17 = sbr.rel (0) target = $region9
  $region8: #{_mlp_forward_impl.1} parent=0 // pred_region
    _
  $region9: #{_mlp_forward_impl.1} parent=0 // pred_fallthru
    _
  // Predicated region
  $region10: #{_mlp_forward_impl.1} parent=0 // pred_check
    _
  $region11: #{_mlp_forward_impl.1} parent=0 // pred_check_branch
    %19 = sbr.rel (0) target = $region13
  $region12: #{_mlp_forward_impl.1} parent=0 // pred_region
    _
  $region13: #{_mlp_forward_impl.1} parent=0 // pred_fallthru
    _
  // Predicated region
  $region14: #{_mlp_forward_impl.1} parent=0 // pred_check
    _
  $region15: #{_mlp_forward_impl.1} parent=0 // pred_check_branch
    %21 = sbr.rel (0) target = $region17
  $region16: #{_mlp_forward_impl.1} parent=0 // pred_region
    _
  $region17: #{_mlp_forward_impl.1} parent=0 // pred_fallthru
    _
  // Predicated region
  $region18: #{_mlp_forward_impl.1} parent=0 // pred_check
    _
  $region19: #{_mlp_forward_impl.1} parent=0 // pred_check_branch
    %23 = sbr.rel (0) target = $region21
  $region20: #{_mlp_forward_impl.1} parent=0 // pred_region
    _
  $region21: #{_mlp_forward_impl.1} parent=0 // pred_fallthru
    _
  // Predicated region
  $region22: #{_mlp_forward_impl.1} parent=0 // pred_check
    _
  $region23: #{_mlp_forward_impl.1} parent=0 // pred_check_branch
    %25 = sbr.rel (0) target = $region25
  $region24: #{_mlp_forward_impl.1} parent=0 // pred_region
    _
  $region25: #{_mlp_forward_impl.1} parent=0 // pred_fallthru
    _
  // Predicated region
  $region26: #{_mlp_forward_impl.1} parent=0 // pred_check
    _
  $region27: #{_mlp_forward_impl.1} parent=0 // pred_check_branch
    %27 = sbr.rel (0) target = $region29
  $region28: #{_mlp_forward_impl.1} parent=0 // pred_region
    _
  $region29: #{_mlp_forward_impl.1} parent=0 // pred_fallthru
    _
  // Predicated region
  $region30: #{_mlp_forward_impl.1} parent=0 // pred_check
    _
  $region31: #{_mlp_forward_impl.1} parent=0 // pred_check_branch
    %29 = sbr.rel (0) target = $region33
  $region32: #{_mlp_forward_impl.1} parent=0 // pred_region
    _
  $region33: #{_mlp_forward_impl.1} parent=0 // pred_fallthru
    _
  // Predicated region
  $region34: #{_mlp_forward_impl.1} parent=0 // pred_check
    _
  $region35: #{_mlp_forward_impl.1} parent=0 // pred_check_branch
    %31 = sbr.rel (0) target = $region37
  $region36: #{_mlp_forward_impl.1} parent=0 // pred_region
    _
  $region37: #{_mlp_forward_impl.1} parent=0 // pred_fallthru
    _
  %v32 = vld [vmem:[%s0] sm:$0xf]
  %v33 = vld [vmem:[%s1] sm:$0xff]
  %v34 = vld [vmem:[%s1 + $0x8] sm:$0xff]
  %v35 = vld [vmem:[%s2] sm:$0xff]
  %v36 = vld [vmem:[%s2 + $0x8] sm:$0xff]
  %38 = vset.pattern.permute.xlu0 0
  %39 = vperm.xlu0 %38, %v35
  %v40 = vpop.permute.xlu0 %39
  %43 = vset.pattern.permute.xlu0 0
  %44 = vperm.xlu0 %43, %v36
  %v45 = vpop.permute.xlu0 %44
  %vm47 = vcmask 31744
  %v49 = vsel %vm47, %v33, 0
  %v52 = vsel %vm47, %v34, 0
  %vm54 = vcmask 1043456
  %v56 = vsel %vm54, %v32, 0
  %58 = vmatpush.msra.mxu0 0.0
  %59 = vmatpush.msra.mxu0 0.0
  %60 = vmatpush.msra.mxu0 0.0
  %61 = vmatpush.msra.mxu0 0.0
  %62 = vmatpush.msra.mxu0 0.0
  %63 = vmatpush.msra.mxu0 0.0
  %64 = vmatpush.msra.mxu0 0.0
  %65 = vmatpush.msra.mxu0 0.0
  %66 = vmatpush.msra.mxu0 0.0
  %67 = vmatpush.msra.mxu0 0.0
  %68 = vmatpush.msra.mxu0 0.0
  %69 = vmatpush.msra.mxu0 0.0
  %70 = vmatpush.msra.mxu0 0.0
  %71 = vmatpush.msra.mxu0 0.0
  %72 = vmatpush.msra.mxu0 0.0
  %73 = vmatpush.msra.mxu0 %v56
  %74 = vmatmul.f32.gmra.mxu0 %v49
  %v75 = vpop.f32.mrf.mxu0
  %v76 = vadd.f32 %v40, %v75
  %77 = vmatmul.f32.gmra.mxu0 %v52
  %v78 = vpop.f32.mrf.mxu0
  %v79 = vadd.f32 %v45, %v78
  %80 = vdwg.mxu0
  %v81 = vmax.f32 %v76, 0.0
  %v82 = vmax.f32 %v79, 0.0
  %v83 = vld [vmem:[%s3] sm:$0xff]
  %v84 = vld [vmem:[%s3 + $0x8] sm:$0xff]
  %v85 = vld [vmem:[%s3 + $0x10] sm:$0xff]
  %v86 = vld [vmem:[%s3 + $0x18] sm:$0xff]
  %v87 = vld [vmem:[%s4] sm:$0xff]
  %v88 = vld [vmem:[%s4 + $0x8] sm:$0xff]
  %v89 = vld [vmem:[%s4 + $0x10] sm:$0xff]
  %v90 = vld [vmem:[%s4 + $0x18] sm:$0xff]
  %92 = vset.pattern.permute.xlu0 0
  %93 = vperm.xlu0 %92, %v87
  %v94 = vpop.permute.xlu0 %93
  %97 = vset.pattern.permute.xlu0 0
  %98 = vperm.xlu0 %97, %v88
  %v99 = vpop.permute.xlu0 %98
  %102 = vset.pattern.permute.xlu0 0
  %103 = vperm.xlu0 %102, %v89
  %v104 = vpop.permute.xlu0 %103
  %107 = vset.pattern.permute.xlu0 0
  %108 = vperm.xlu0 %107, %v90
  %v109 = vpop.permute.xlu0 %108
  %vm111 = vcmask 130048
  %v113 = vsel %vm111, %v83, 0
  %v116 = vsel %vm111, %v84, 0
  %v119 = vsel %vm111, %v85, 0
  %v122 = vsel %vm111, %v86, 0
  %124 = vmatpush.msra.mxu0 0.0
  %125 = vmatpush.msra.mxu0 0.0
  %126 = vmatpush.msra.mxu0 0.0
  %127 = vmatpush.msra.mxu0 0.0
  %128 = vmatpush.msra.mxu0 0.0
  %129 = vmatpush.msra.mxu0 0.0
  %130 = vmatpush.msra.mxu0 0.0
  %131 = vmatpush.msra.mxu0 0.0
  %132 = vmatpush.msra.mxu0 0.0
  %133 = vmatpush.msra.mxu0 0.0
  %134 = vmatpush.msra.mxu0 0.0
  %135 = vmatpush.msra.mxu0 0.0
  %136 = vmatpush.msra.mxu0 0.0
  %137 = vmatpush.msra.mxu0 0.0
  %138 = vmatpush.msra.mxu0 %v82
  %139 = vmatpush.msra.mxu0 %v81
  %140 = vmatmul.f32.gmra.mxu0 %v113
  %v141 = vpop.f32.mrf.mxu0
  %v142 = vadd.f32 %v94, %v141
  %143 = vmatmul.f32.gmra.mxu0 %v116
  %v144 = vpop.f32.mrf.mxu0
  %v145 = vadd.f32 %v99, %v144
  %146 = vmatmul.f32.gmra.mxu0 %v119
  %v147 = vpop.f32.mrf.mxu0
  %v148 = vadd.f32 %v104, %v147
  %149 = vmatmul.f32.gmra.mxu0 %v122
  %v150 = vpop.f32.mrf.mxu0
  %v151 = vadd.f32 %v109, %v150
  %152 = vdwg.mxu0
  %v153 = vmax.f32 %v142, 0.0
  %v154 = vmax.f32 %v145, 0.0
  %v155 = vmax.f32 %v148, 0.0
  %v156 = vmax.f32 %v151, 0.0
  %v157 = vld [vmem:[%s5] sm:$0xff]
  %v158 = vld [vmem:[%s5 + $0x8] sm:$0xff]
  %v159 = vld [vmem:[%s6] sm:$0xff]
  %v160 = vld [vmem:[%s6 + $0x8] sm:$0xff]
  %162 = vset.pattern.permute.xlu0 0
  %163 = vperm.xlu0 %162, %v159
  %v164 = vpop.permute.xlu0 %163
  %167 = vset.pattern.permute.xlu0 0
  %168 = vperm.xlu0 %167, %v160
  %v169 = vpop.permute.xlu0 %168
  %vm171 = vcmask 261120
  %v173 = vsel %vm171, %v157, 0
  %v176 = vsel %vm171, %v158, 0
  %178 = vmatpush.msra.mxu0 0.0
  %179 = vmatpush.msra.mxu0 0.0
  %180 = vmatpush.msra.mxu0 0.0
  %181 = vmatpush.msra.mxu0 0.0
  %182 = vmatpush.msra.mxu0 0.0
  %183 = vmatpush.msra.mxu0 0.0
  %184 = vmatpush.msra.mxu0 0.0
  %185 = vmatpush.msra.mxu0 0.0
  %186 = vmatpush.msra.mxu0 0.0
  %187 = vmatpush.msra.mxu0 0.0
  %188 = vmatpush.msra.mxu0 0.0
  %189 = vmatpush.msra.mxu0 0.0
  %190 = vmatpush.msra.mxu0 %v156
  %191 = vmatpush.msra.mxu0 %v155
  %192 = vmatpush.msra.mxu0 %v154
  %193 = vmatpush.msra.mxu0 %v153
  %194 = vmatmul.f32.gmra.mxu0 %v173
  %v195 = vpop.f32.mrf.mxu0
  %v196 = vadd.f32 %v164, %v195
  %197 = vmatmul.f32.gmra.mxu0 %v176
  %v198 = vpop.f32.mrf.mxu0
  %v199 = vadd.f32 %v169, %v198
  %200 = vdwg.mxu0
  %v201 = vmax.f32 %v196, 0.0
  %v202 = vmax.f32 %v199, 0.0
  %v203 = vld [vmem:[%s7] sm:$0x7]
  %v204 = vld [vmem:[%s8] sm:$0x7]
  %206 = vset.pattern.permute.xlu0 0
  %207 = vperm.xlu0 %206, %v204
  %v208 = vpop.permute.xlu0 %207
  %v211 = vsel %vm111, %v203, 0
  %213 = vmatpush.msra.mxu0 0.0
  %214 = vmatpush.msra.mxu0 0.0
  %215 = vmatpush.msra.mxu0 0.0
  %216 = vmatpush.msra.mxu0 0.0
  %217 = vmatpush.msra.mxu0 0.0
  %218 = vmatpush.msra.mxu0 0.0
  %219 = vmatpush.msra.mxu0 0.0
  %220 = vmatpush.msra.mxu0 0.0
  %221 = vmatpush.msra.mxu0 0.0
  %222 = vmatpush.msra.mxu0 0.0
  %223 = vmatpush.msra.mxu0 0.0
  %224 = vmatpush.msra.mxu0 0.0
  %225 = vmatpush.msra.mxu0 0.0
  %226 = vmatpush.msra.mxu0 0.0
  %227 = vmatpush.msra.mxu0 %v202
  %228 = vmatpush.msra.mxu0 %v201
  %229 = vmatmul.f32.gmra.mxu0 %v211
  %v230 = vpop.f32.mrf.mxu0
  %v231 = vadd.f32 %v208, %v230
  %232 = vdwg.mxu0
  %233 = vst [vmem:[%s9] sm:$0x7] %v231
  // Predicated region
  $region38: #{_mlp_forward_impl.1} parent=0 // pred_check
    _
  $region39: #{_mlp_forward_impl.1} parent=0 // pred_check_branch
    %235 = sbr.rel (0) target = $region41
  $region40: #{_mlp_forward_impl.1} parent=0 // pred_region
    _
  $region41: #{_mlp_forward_impl.1} parent=0 // pred_fallthru
    _
  // Predicated region
  $region42: #{_mlp_forward_impl.1} parent=0 // pred_check
    _
  $region43: #{_mlp_forward_impl.1} parent=0 // pred_check_branch
    %237 = sbr.rel (0) target = $region45
  $region44: #{_mlp_forward_impl.1} parent=0 // pred_region
    _
  $region45: #{_mlp_forward_impl.1} parent=0 // pred_fallthru
    _

</llo_original>
